<compile_context>
chip_gen: v7x
topology: tpu7x:2x2x1
jax: 0.10.0
libtpu: 0.0.40
codegen_flags: <defaults>
</compile_context>

<pallas_src>
import functools

import jax
import jax.numpy as jnp
import numpy as np
from jax import lax
from jax.experimental import pallas as pl
from jax.experimental.pallas import tpu as pltpu


# ----------------------------- hardware probes ------------------------------

def _tpu_info():
    try:
        return pltpu.get_tpu_info()
    except Exception:
        return None


def _vmem_capacity_bytes():
    info = _tpu_info()
    if info is not None:
        for name in ("vmem_capacity_bytes", "vmem_bytes", "vmem_size_bytes"):
            try:
                v = int(getattr(info, name))
            except (AttributeError, TypeError, ValueError):
                continue
            if v > 0:
                return v
    return 64 * 1024 * 1024  # conservative default: v7x physical VMEM


def _num_tensorcores():
    info = _tpu_info()
    if info is not None:
        for name in ("num_cores", "core_count", "num_tensorcores",
                     "tensorcore_count", "cores_per_chip",
                     "tensor_cores_per_chip"):
            try:
                v = int(getattr(info, name))
            except (AttributeError, TypeError, ValueError):
                continue
            if v > 0:
                return v
    try:
        kind = jax.devices()[0].device_kind.lower()
        if "v7" in kind:          # v7x: 2 TensorCores per chip
            return 2
    except Exception:
        pass
    return 1                      # v5e / v6e: single TensorCore per chip


# ------------------------------ tile selection -------------------------------

def _round_up(v, m):
    return ((v + m - 1) // m) * m


def _sublane(itemsize):
    return {4: 8, 2: 16, 1: 32}.get(itemsize, 8)


def _vmem_footprint(tile, d, x_itemsize, s_itemsize):
    """Padded VMEM bytes for one grid step, double-buffering included."""
    d_sub = _round_up(max(d, 1), _sublane(x_itemsize))
    x_b = 2 * d_sub * tile * x_itemsize                   # (D, TILE) x tile
    s_b = 2 * _sublane(s_itemsize) * tile * s_itemsize    # (1, TILE) s tile
    p_b = 2 * 8 * tile * 4                                # (1, TILE) pred out
    a_b = 2 * 8 * tile * 4                                # (8, TILE) stats acc
    w_b = 2 * 8 * _round_up(max(d, 1), 128) * x_itemsize  # (1, D) weights
    return x_b + s_b + p_b + a_b + w_b


def _pick_tile_n(n, d, x_itemsize, s_itemsize, vmem_budget):
    """Byte-based tile sizing: aim for ~2 MiB of x payload per tile."""
    n128 = _round_up(max(n, 1), 128)
    t = (2 << 20) // max(d * x_itemsize, 1)
    t = max(512, min(32768, t))
    t = max(128, (t // 128) * 128)
    t = min(t, n128)
    while t > 128 and _vmem_footprint(t, d, x_itemsize, s_itemsize) > vmem_budget:
        t = max(128, ((t // 2) // 128) * 128)
    # TODO(synk): for very wide features (D so large that even a 128-col tile
    # exceeds the VMEM budget) add a K (D) grid axis with a logits accumulator.
    return t


# --------------------------------- kernel ------------------------------------

def _lr_dp_kernel(x_ref, s_ref, w_ref, b_ref, pred_ref, acc_ref, *,
                  n_rows, tile_n, tiles_per_core, num_real_tiles, needs_mask):
    p = pl.program_id(0)      # TensorCore-split axis ("parallel")
    i = pl.program_id(1)      # accumulation axis ("arbitrary")

    # Zero this core's resident statistics block on its first step.
    @pl.when(i == 0)
    def _init():
        acc_ref[...] = jnp.zeros_like(acc_ref)

    # ---- linear + sigmoid, lane-dense, MXU-native: (1,D)@(D,TILE)->(1,TILE) ----
    x = x_ref[...]                                   # (D, TILE), native dtype
    w = w_ref[...]                                   # (1, D), same dtype
    logits = jnp.dot(w, x, preferred_element_type=jnp.float32)
    logits = logits + b_ref[0, 0]
    pred = jax.nn.sigmoid(logits)                    # (1, TILE) f32
    pred_ref[...] = pred

    # ---- masked 'dp' group statistics (3 partial rows; rest derived later) ----
    s = s_ref[...]                                   # (1, TILE) bf16
    if needs_mask:
        t = p * tiles_per_core + i
        col = lax.broadcasted_iota(jnp.int32, (1, tile_n), 1)
        row = t * tile_n + col
        valid = jnp.logical_and(row < n_rows, t < num_real_tiles)
        pred_v = jnp.where(valid, pred, 0.0)
        m0 = jnp.logical_and(valid, s == 0)
    else:
        pred_v = pred
        m0 = s == 0

    acc_ref[0:1, :] += pred_v                        # sum(pred) over valid rows
    acc_ref[1:2, :] += jnp.where(m0, pred, 0.0)      # sum(pred | s == 0)
    acc_ref[2:3, :] += m0.astype(jnp.float32)        # count(s == 0)


# -------------------------------- wrapper -------------------------------------

@functools.partial(jax.jit, static_argnames=("tile_n", "features_major"))
def lr_forward(x, s, y, w, b, M, c, *, tile_n=None, features_major=False):
    """Forward pass of LR with fairness == 'dp'.

    x: (N, D) features, or (D, N) if features_major=True (skips the one-off
    wrapper transpose).  s: (N,) binary sensitive attribute in {0, 1}.
    y: unused by the 'dp' constraint (kept for API parity with forward(x,s,y)).
    Returns (prediction (N, 1) float32, m_mu_q (4,) float32).
    """
    del y
    # TODO(synk): only the 'dp' fairness branch is implemented; the 'eo' and
    # 'none' branches of the PyTorch module are not translated.
    if features_major:
        d, n = x.shape
    else:
        n, d = x.shape

    x_dtype = x.dtype if x.dtype in (jnp.bfloat16, jnp.float32) else jnp.float32
    x_isz = jnp.dtype(x_dtype).itemsize
    s_dtype = jnp.bfloat16
    s_isz = 2

    cap = _vmem_capacity_bytes()
    budget = min(cap // 2, 48 * 1024 * 1024)
    tile = tile_n if tile_n is not None else _pick_tile_n(n, d, x_isz, s_isz, budget)

    num_tiles = -(-n // tile)
    nc = 2 if (_num_tensorcores() >= 2 and num_tiles >= 2) else 1
    t_per_core = -(-num_tiles // nc)
    total_tiles = nc * t_per_core
    n_pad = num_tiles * tile
    needs_mask = (n % tile != 0) or (total_tiles != num_tiles)
    last_blk = num_tiles - 1

    footprint = _vmem_footprint(tile, d, x_isz, s_isz)
    vmem_limit = int(min(max(32 << 20, footprint + (8 << 20)), (cap * 7) // 8))

    # One-off layout pass: (N, D) -> (D, N) so the kernel streams lane-dense,
    # MXU-native tiles (costs one extra read+write of x; producers holding
    # (D, N) already should pass features_major=True to skip it).
    x_t = (x if features_major else jnp.transpose(x)).astype(x_dtype)
    s_row = s.reshape(1, n).astype(s_dtype)
    w_row = w.reshape(1, d).astype(x_dtype)
    b_sc = b.reshape(1, 1).astype(jnp.float32)

    def col_map(p, i):
        # Clamp so a 2-core overhang step just repeats the last real block
        # (its stats contribution is masked out in the kernel).
        return (0, jnp.minimum(p * t_per_core + i, last_blk))

    kernel = functools.partial(
        _lr_dp_kernel, n_rows=n, tile_n=tile, tiles_per_core=t_per_core,
        num_real_tiles=num_tiles, needs_mask=needs_mask)

    pred_row, acc = pl.pallas_call(
        kernel,
        grid=(nc, t_per_core),
        in_specs=[
            pl.BlockSpec((d, tile), col_map),                      # x_t (D, N)
            pl.BlockSpec((1, tile), col_map),                      # s   (1, N)
            pl.BlockSpec((1, d), lambda p, i: (0, 0)),             # w (resident)
            pl.BlockSpec(memory_space=pltpu.MemorySpace.SMEM),     # b (scalar)
        ],
        out_specs=(
            pl.BlockSpec((1, tile), col_map),                      # predictions
            pl.BlockSpec((None, 8, tile), lambda p, i: (p, 0, 0)),  # stats acc
        ),
        out_shape=(
            jax.ShapeDtypeStruct((1, n_pad), jnp.float32),
            jax.ShapeDtypeStruct((nc, 8, tile), jnp.float32),
        ),
        compiler_params=pltpu.CompilerParams(
            dimension_semantics=("parallel", "arbitrary"),
            vmem_limit_bytes=vmem_limit,
        ),
        cost_estimate=pl.CostEstimate(
            flops=2 * n * d,
            transcendentals=n,
            bytes_accessed=n * d * x_isz + n * s_isz + n * 4,
        ),
    )(x_t, s_row, w_row, b_sc)

    # Consumer wants the module-faithful (N, 1); callers that can take (1, N)
    # may use pred_row directly and skip this relayout.
    prediction = pred_row[0, :n].reshape(n, 1)

    # ---- tiny finalize off the hot path: lane-reduce partials, derive the
    # s==1 group from totals (s is binary), then mu and M @ mu - c. ----
    stats = jnp.sum(acc, axis=(0, 2))                 # (8,)
    sum_all, sum0, cnt0 = stats[0], stats[1], stats[2]
    nf = jnp.float32(n)
    cnt1 = nf - cnt0
    sum1 = sum_all - sum0
    mu0 = jnp.where(cnt0 > 0, sum0 / jnp.maximum(cnt0, 1.0), 0.0)
    mu1 = jnp.where(cnt1 > 0, sum1 / jnp.maximum(cnt1, 1.0), 0.0)
    mu_all = sum_all / nf
    mu = jnp.stack([mu0, mu1, mu_all])
    m_mu_q = jnp.dot(M.astype(jnp.float32), mu) - c.astype(jnp.float32).reshape(-1)
    return prediction, m_mu_q


def build_dp_constraints(bound):
    """Replicates the 'dp' branch of LR.__init__: M (4, 3) and c (4,)."""
    eps = bound
    M = np.zeros((4, 3), dtype=np.float32)
    M[0, 0] = 1.0;  M[0, -1] = -1.0     # i = 0, j = 0
    M[1, 0] = -1.0; M[1, -1] = 1.0      # i = 1, j = 1
    M[2, 1] = 1.0;  M[2, -1] = -1.0     # i = 2, j = 0
    M[3, 1] = -1.0; M[3, -1] = 1.0      # i = 3, j = 1
    c = np.full((4,), eps, dtype=np.float32)
    return jnp.asarray(M), jnp.asarray(c)


if __name__ == "__main__":
    input_size = 16
    N = 2048
    bound = 0.05

    key = jax.random.PRNGKey(0)
    kx, ks, ky, kw, kb = jax.random.split(key, 5)

    x = jax.random.normal(kx, (N, input_size), dtype=jnp.float32)
    s = jax.random.bernoulli(ks, 0.5, (N,)).astype(jnp.float32)   # sensitive {0,1}
    y = jax.random.bernoulli(ky, 0.5, (N,)).astype(jnp.float32)   # label (unused in 'dp')

    # fc1 = nn.Linear(input_size, 1): weight (1, input_size), bias (1,)
    w_fc1 = (jax.random.normal(kw, (1, input_size), dtype=jnp.float32)
             / jnp.sqrt(jnp.float32(input_size)))
    b_fc1 = jax.random.normal(kb, (1,), dtype=jnp.float32) * 0.1

    M, c = build_dp_constraints(bound)

    pred, m_mu_q = lr_forward(x, s, y, w_fc1, b_fc1, M, c)
    jax.block_until_ready((pred, m_mu_q))

    # ---- pure-JAX reference ----
    pred_ref = jax.nn.sigmoid(x @ w_fc1.T + b_fc1)          # (N, 1)
    p_flat = pred_ref[:, 0]
    m0 = (s == 0.0).astype(jnp.float32)
    m1 = (s == 1.0).astype(jnp.float32)
    c0 = jnp.sum(m0)
    c1 = jnp.sum(m1)
    mu0 = jnp.where(c0 > 0, jnp.sum(p_flat * m0) / jnp.maximum(c0, 1.0), 0.0)
    mu1 = jnp.where(c1 > 0, jnp.sum(p_flat * m1) / jnp.maximum(c1, 1.0), 0.0)
    mu = jnp.stack([mu0, mu1, jnp.mean(p_flat)])
    mmu_ref = M @ mu - c

    np.testing.assert_allclose(np.asarray(pred), np.asarray(pred_ref),
                               rtol=5e-4, atol=5e-4)
    np.testing.assert_allclose(np.asarray(m_mu_q), np.asarray(mmu_ref),
                               rtol=5e-4, atol=5e-4)
    print("KERNEL_OK")
</pallas_src>

<mosaic_0001>
module attributes {stable_mosaic.version = 11 : i64} {
  func.func @_lr_dp_kernel(%arg0: i32, %arg1: i32, %arg2: memref<16x2048xf32, #tpu.memory_space<vmem>>, %arg3: memref<1x2048xbf16, #tpu.memory_space<vmem>>, %arg4: memref<1x16xf32, #tpu.memory_space<vmem>>, %arg5: memref<1x1xf32, #tpu.memory_space<smem>>, %arg6: memref<1x2048xf32, #tpu.memory_space<vmem>>, %arg7: memref<1x8x2048xf32, #tpu.memory_space<vmem>>) attributes {dimension_semantics = [#tpu.dimension_semantics<parallel>, #tpu.dimension_semantics<arbitrary>], iteration_bounds = array<i64: 1, 1>, scalar_prefetch = 0 : i64, scratch_operands = 0 : i64, tpu.core_type = #tpu.core_type<tc>, window_params = [{transform_indices = @transform_0, window_bounds = array<i64: 16, 2048>}, {transform_indices = @transform_1, window_bounds = array<i64: 1, 2048>}, {pipeline_mode = #tpu.pipeline_mode<synchronous>, transform_indices = @transform_2, window_bounds = array<i64: 1, 16>}, {transform_indices = @transform_3, window_bounds = array<i64: 1, 1>}, {transform_indices = @transform_4, window_bounds = array<i64: 1, 2048>}, {transform_indices = @transform_5, window_bounds = array<i64: 1, 8, 2048>}]} {
    %c0_i32 = arith.constant 0 : i32
    %0 = arith.cmpi eq, %arg1, %c0_i32 : i32
    %1 = arith.extui %0 : i1 to i32
    %c0_i32_0 = arith.constant 0 : i32
    %2 = arith.cmpi ne, %1, %c0_i32_0 : i32
    scf.if %2 {
      %cst_29 = arith.constant 0.000000e+00 : f32
      %40 = vector.broadcast %cst_29 : f32 to vector<8x2048xf32>
      %c0_30 = arith.constant 0 : index
      %c0_31 = arith.constant 0 : index
      %c0_32 = arith.constant 0 : index
      %41 = vector.load %arg7[%c0_30, %c0_31, %c0_32] : memref<1x8x2048xf32, #tpu.memory_space<vmem>>, vector<1x8x2048xf32>
      %42 = vector.shape_cast %41 : vector<1x8x2048xf32> to vector<8x2048xf32>
      %43 = vector.shape_cast %40 : vector<8x2048xf32> to vector<1x8x2048xf32>
      tpu.vector_store %arg7[%c0_30, %c0_31, %c0_32], %43 {strides = array<i32>} : memref<1x8x2048xf32, #tpu.memory_space<vmem>>, vector<1x8x2048xf32>,
    } else {
    }
    %c0 = arith.constant 0 : index
    %c0_1 = arith.constant 0 : index
    %3 = vector.load %arg2[%c0, %c0_1] : memref<16x2048xf32, #tpu.memory_space<vmem>>, vector<16x2048xf32>
    %c0_2 = arith.constant 0 : index
    %c0_3 = arith.constant 0 : index
    %4 = vector.load %arg4[%c0_2, %c0_3] : memref<1x16xf32, #tpu.memory_space<vmem>>, vector<1x16xf32>
    %cst = arith.constant dense<0.000000e+00> : vector<1x2048xf32>
    %5 = tpu.matmul %4, %3, %cst {dimension_numbers = #tpu.dot_dimension_numbers<[1], [0], [0], [1], [0, 0, 1, 1], [], []>} : vector<1x16xf32>, vector<16x2048xf32>, vector<1x2048xf32> -> vector<1x2048xf32>
    %c0_4 = arith.constant 0 : index
    %c0_5 = arith.constant 0 : index
    %6 = memref.load %arg5[%c0_4, %c0_5] : memref<1x1xf32, #tpu.memory_space<smem>>
    %7 = vector.broadcast %6 : f32 to vector<1x2048xf32>
    %8 = arith.addf %5, %7 : vector<1x2048xf32>
    %9 = arith.negf %8 : vector<1x2048xf32>
    %10 = math.exp %9 : vector<1x2048xf32>
    %cst_6 = arith.constant 1.000000e+00 : f32
    %11 = vector.broadcast %cst_6 : f32 to vector<1x2048xf32>
    %12 = arith.addf %11, %10 : vector<1x2048xf32>
    %13 = arith.divf %11, %12 : vector<1x2048xf32>
    %c0_7 = arith.constant 0 : index
    %c0_8 = arith.constant 0 : index
    %14 = vector.load %arg6[%c0_7, %c0_8] : memref<1x2048xf32, #tpu.memory_space<vmem>>, vector<1x2048xf32>
    tpu.vector_store %arg6[%c0_7, %c0_8], %13 {strides = array<i32>} : memref<1x2048xf32, #tpu.memory_space<vmem>>, vector<1x2048xf32>,
    %c0_9 = arith.constant 0 : index
    %c0_10 = arith.constant 0 : index
    %15 = vector.load %arg3[%c0_9, %c0_10] : memref<1x2048xbf16, #tpu.memory_space<vmem>>, vector<1x2048xbf16>
    %cst_11 = arith.constant 0.000000e+00 : bf16
    %16 = vector.broadcast %cst_11 : bf16 to vector<1x2048xbf16>
    %17 = arith.cmpf oeq, %15, %16 : vector<1x2048xbf16>
    %c0_12 = arith.constant 0 : index
    %c0_13 = arith.constant 0 : index
    %c0_14 = arith.constant 0 : index
    %18 = vector.load %arg7[%c0_12, %c0_13, %c0_14] : memref<1x8x2048xf32, #tpu.memory_space<vmem>>, vector<1x1x2048xf32>
    %19 = vector.shape_cast %18 : vector<1x1x2048xf32> to vector<1x2048xf32>
    %20 = arith.addf %19, %13 : vector<1x2048xf32>
    %c0_15 = arith.constant 0 : index
    %c0_16 = arith.constant 0 : index
    %c0_17 = arith.constant 0 : index
    %21 = vector.load %arg7[%c0_15, %c0_16, %c0_17] : memref<1x8x2048xf32, #tpu.memory_space<vmem>>, vector<1x1x2048xf32>
    %22 = vector.shape_cast %21 : vector<1x1x2048xf32> to vector<1x2048xf32>
    %23 = vector.shape_cast %20 : vector<1x2048xf32> to vector<1x1x2048xf32>
    tpu.vector_store %arg7[%c0_15, %c0_16, %c0_17], %23 {strides = array<i32>} : memref<1x8x2048xf32, #tpu.memory_space<vmem>>, vector<1x1x2048xf32>,
    %c0_18 = arith.constant 0 : index
    %c1 = arith.constant 1 : index
    %c0_19 = arith.constant 0 : index
    %24 = vector.load %arg7[%c0_18, %c1, %c0_19] : memref<1x8x2048xf32, #tpu.memory_space<vmem>>, vector<1x1x2048xf32>
    %25 = vector.shape_cast %24 : vector<1x1x2048xf32> to vector<1x2048xf32>
    %cst_20 = arith.constant 0.000000e+00 : f32
    %26 = vector.broadcast %cst_20 : f32 to vector<1x2048xf32>
    %27 = arith.select %17, %13, %26 : vector<1x2048xi1>, vector<1x2048xf32>
    %28 = arith.addf %25, %27 : vector<1x2048xf32>
    %c0_21 = arith.constant 0 : index
    %c1_22 = arith.constant 1 : index
    %c0_23 = arith.constant 0 : index
    %29 = vector.load %arg7[%c0_21, %c1_22, %c0_23] : memref<1x8x2048xf32, #tpu.memory_space<vmem>>, vector<1x1x2048xf32>
    %30 = vector.shape_cast %29 : vector<1x1x2048xf32> to vector<1x2048xf32>
    %31 = vector.shape_cast %28 : vector<1x2048xf32> to vector<1x1x2048xf32>
    tpu.vector_store %arg7[%c0_21, %c1_22, %c0_23], %31 {strides = array<i32>} : memref<1x8x2048xf32, #tpu.memory_space<vmem>>, vector<1x1x2048xf32>,
    %c0_24 = arith.constant 0 : index
    %c2 = arith.constant 2 : index
    %c0_25 = arith.constant 0 : index
    %32 = vector.load %arg7[%c0_24, %c2, %c0_25] : memref<1x8x2048xf32, #tpu.memory_space<vmem>>, vector<1x1x2048xf32>
    %33 = vector.shape_cast %32 : vector<1x1x2048xf32> to vector<1x2048xf32>
    %34 = arith.extui %17 : vector<1x2048xi1> to vector<1x2048xi32>
    %35 = arith.sitofp %34 : vector<1x2048xi32> to vector<1x2048xf32>
    %36 = arith.addf %33, %35 : vector<1x2048xf32>
    %c0_26 = arith.constant 0 : index
    %c2_27 = arith.constant 2 : index
    %c0_28 = arith.constant 0 : index
    %37 = vector.load %arg7[%c0_26, %c2_27, %c0_28] : memref<1x8x2048xf32, #tpu.memory_space<vmem>>, vector<1x1x2048xf32>
    %38 = vector.shape_cast %37 : vector<1x1x2048xf32> to vector<1x2048xf32>
    %39 = vector.shape_cast %36 : vector<1x2048xf32> to vector<1x1x2048xf32>
    tpu.vector_store %arg7[%c0_26, %c2_27, %c0_28], %39 {strides = array<i32>} : memref<1x8x2048xf32, #tpu.memory_space<vmem>>, vector<1x1x2048xf32>,
    return
  }
  func.func @transform_0(%arg0: i32, %arg1: i32) -> (i32, i32) {
    %c1_i32 = arith.constant 1 : i32
    %0 = arith.muli %arg0, %c1_i32 : i32
    %1 = arith.addi %0, %arg1 : i32
    %c0_i32 = arith.constant 0 : i32
    %2 = arith.minsi %1, %c0_i32 : i32
    %c0_i32_0 = arith.constant 0 : i32
    %c0_i32_1 = arith.constant 0 : i32
    return %c0_i32_0, %2 : i32, i32
  }
  func.func @transform_1(%arg0: i32, %arg1: i32) -> (i32, i32) {
    %c1_i32 = arith.constant 1 : i32
    %0 = arith.muli %arg0, %c1_i32 : i32
    %1 = arith.addi %0, %arg1 : i32
    %c0_i32 = arith.constant 0 : i32
    %2 = arith.minsi %1, %c0_i32 : i32
    %c0_i32_0 = arith.constant 0 : i32
    %c0_i32_1 = arith.constant 0 : i32
    return %c0_i32_0, %2 : i32, i32
  }
  func.func @transform_2(%arg0: i32, %arg1: i32) -> (i32, i32) {
    %c0_i32 = arith.constant 0 : i32
    %c0_i32_0 = arith.constant 0 : i32
    %c0_i32_1 = arith.constant 0 : i32
    return %c0_i32, %c0_i32_0 : i32, i32
  }
  func.func @transform_3(%arg0: i32, %arg1: i32) -> (i32, i32) {
    %c0_i32 = arith.constant 0 : i32
    %c0_i32_0 = arith.constant 0 : i32
    %c0_i32_1 = arith.constant 0 : i32
    return %c0_i32, %c0_i32_0 : i32, i32
  }
  func.func @transform_4(%arg0: i32, %arg1: i32) -> (i32, i32) {
    %c1_i32 = arith.constant 1 : i32
    %0 = arith.muli %arg0, %c1_i32 : i32
    %1 = arith.addi %0, %arg1 : i32
    %c0_i32 = arith.constant 0 : i32
    %2 = arith.minsi %1, %c0_i32 : i32
    %c0_i32_0 = arith.constant 0 : i32
    %c0_i32_1 = arith.constant 0 : i32
    return %c0_i32_0, %2 : i32, i32
  }
  func.func @transform_5(%arg0: i32, %arg1: i32) -> (i32, i32, i32) {
    %c0_i32 = arith.constant 0 : i32
    %c0_i32_0 = arith.constant 0 : i32
    %c0_i32_1 = arith.constant 0 : i32
    return %arg0, %c0_i32, %c0_i32_0 : i32, i32, i32
  }
}

</mosaic_0001>

<llo_original>
// kernel: sub.5
$region0: #{sub.5}
  #allocation2 [shape = 's32[1]{0}', space=sflag, size = 0x4, scoped, tag = 'scoped memory for sub.5']
  %s0 = inlined_call_operand.vmem [shape: f32[4], index: 0, kind: input, shape index: {}]
  %s1 = inlined_call_operand.vmem [shape: f32[4], index: 1, kind: input, shape index: {}]
  %s2 = inlined_call_operand.hbm [shape: f32[4], index: 2, kind: output, shape index: {}]
  $region1: #{sub.5} parent=0
    #allocation0 [shape = 'u8[512]{0}', space=vmem, size = 0x400, scoped, tag = 'operand span for operand 2']
    #allocation1 [shape = 's32[1]{0}', space=sflag, size = 0x4, scoped, tag = 'scoped memory for sub.5']
    %3 = vsyncpa [#allocation1], 0
    %v4 = vld [vmem:[%s0] sm:$0x1]
    %v5 = vld [vmem:[%s1] sm:$0x1]
    %6 = xla_tuple %v4, %v5
    %7 = xla_tuple %6
    %v8 = vsub.f32 %v4, %v5
    %9 = xla_tuple %v8
    %10 = vst [vmem:[#allocation0] sm:$0x1] %v8
    %s12 = ssub.s32 16, 16
    %13 = vsyncadd [#allocation1], %s12
    %s15 = sshll.u32 [#allocation0], 4
    %s16 = int_to_ptr.vmem [resolvable:$true] %s15
    %18 = dma.vmem_to_hbm [thread:$0]  %s16, 16, %s2, [#allocation1]
    %19 = dma.done [#allocation1], 16
    %20 = vsyncpa [#allocation1], 1

// kernel: lr_forward.1
$region0: #{lr_forward.1}
  #allocation0 [shape = 'u32[]', space=smem, size = 0x4, offset = 0x4, fixed_abs, tag = 'smem constant byte address 0x4 - core index']
  #allocation1 [shape = 'u32[144,128]{1,0:T(1,128)}', space=vmem, size = 0x12000, scoped, tag = 'internal scratch']
  #allocation2 [shape = 'f32[1,1]{1,0:T(1,128)S(6)}', space=smem, size = 0x200, scoped, tag = 'scoped memory for lr_forward.1']
  %s0 = inlined_call_operand.hbm [shape: f32[16,2048], index: 0, kind: input, shape index: {}]
  %s1 = inlined_call_operand.vmem [shape: bf16[1,2048], index: 1, kind: input, shape index: {}]
  %s2 = inlined_call_operand.vmem [shape: f32[1,16], index: 2, kind: input, shape index: {}]
  %s3 = inlined_call_operand.<no memory space> [shape: f32[1,1], index: 3, kind: input, shape index: {}]
  %s4 = inlined_call_operand.hbm [shape: f32[1,2048], index: 4, kind: output, shape index: {0}]
  %s5 = inlined_call_operand.vmem [shape: f32[1,8,2048], index: 5, kind: output, shape index: {1}]
  %6 = xla_tuple %s4, %s5
  %s7 = sld [smem:[#allocation0]]
  $region42: #{lr_forward.1} parent=0
    _
  %s9 = ssub.s32 1, %s7
  %s10 = scalar_select 0, %s9, %s7
  %11 = sst [smem:[#allocation2]] %s3
  $region1: #{lr_forward.1} parent=0
    #allocation3 [shape = 'u8[131072]{0}', space=vmem, size = 0x20000, scoped, tag = 'input window, operand 0, single buffered']
    #allocation4 [shape = 's32[1]{0}', space=sflag, size = 0x4, scoped, tag = 'scoped memory for lr_forward.1']
    #allocation5 [shape = 's32[1]{0}', space=sflag, size = 0x4, scoped, tag = 'scoped memory for lr_forward.1']
    #allocation6 [shape = 'u8[8192]{0}', space=vmem, size = 0x2000, scoped, tag = 'output window, operand 0, single buffered']
    %12 = vsyncpa [#allocation4], 0
    %13 = vsyncpa [#allocation5], 0
    // Predicated region
    $region2: #{lr_forward.1} parent=1 // pred_check
      _
    $region3: #{lr_forward.1} parent=1 // pred_check_branch
      %15 = sbr.rel (0) target = $region5
    $region4: #{lr_forward.1} parent=1 // pred_region
      %s16 = sadd.s32 0, 0
      %p17 = scmp.lt.s32.totalorder %s16, 0
      %s18 = scalar_select %p17, %s16, 0
      %s19 = smul.u32 16, %s18
      %s21 = ssub.s32 4096, 4096
      %22 = vsyncadd [#allocation4], %s21
      %s23 = smul.addr %s19, 128
      %s24 = scalar_lea.hbm %s0, %s23
      %s25 = sshll.u32 [#allocation3], 4
      %s26 = int_to_ptr.vmem [resolvable:$true] %s25
      %31 = dma.hbm_to_vmem [thread:$0]  %s24, 4096, %s26, [#allocation4], 2048, 2048, 128
    $region5: #{lr_forward.1} parent=1 // pred_fallthru
      _
    // Predicated region
    $region6: #{lr_forward.1} parent=1 // pred_check
      _
    $region7: #{lr_forward.1} parent=1 // pred_check_branch
      %33 = sbr.rel (0) target = $region9
    $region8: #{lr_forward.1} parent=1 // pred_region
      %s34 = sadd.s32 0, 0
      %p35 = scmp.lt.s32.totalorder %s34, 0
      %s36 = scalar_select %p35, %s34, 0
      %s37 = smul.u32 16, %s36
      %p38 = scmp.lt.s32.totalorder %s37, 15
      %s39 = scalar_select %p38, %s37, 15
      %s40 = scalar_lea.vmem %s1, %s39
      %s41 = sadd.s32 0, 0
      %p42 = scmp.lt.s32.totalorder %s41, 0
      %s43 = scalar_select %p42, %s41, 0
      %s44 = smul.u32 16, %s43
    $region9: #{lr_forward.1} parent=1 // pred_fallthru
      _
    // Predicated region
    $region10: #{lr_forward.1} parent=1 // pred_check
      _
    $region11: #{lr_forward.1} parent=1 // pred_check_branch
      %46 = sbr.rel (0) target = $region13
    $region12: #{lr_forward.1} parent=1 // pred_region
      _
    $region13: #{lr_forward.1} parent=1 // pred_fallthru
      _
    // Predicated region
    $region14: #{lr_forward.1} parent=1 // pred_check
      _
    $region15: #{lr_forward.1} parent=1 // pred_check_branch
      %48 = sbr.rel (0) target = $region17
    $region16: #{lr_forward.1} parent=1 // pred_region
      _
    $region17: #{lr_forward.1} parent=1 // pred_fallthru
      _
    // Predicated region
    $region18: #{lr_forward.1} parent=1 // pred_check
      _
    $region19: #{lr_forward.1} parent=1 // pred_check_branch
      %50 = sbr.rel (0) target = $region21
    $region20: #{lr_forward.1} parent=1 // pred_region
      %51 = dma.done [#allocation4], 4096
    $region21: #{lr_forward.1} parent=1 // pred_fallthru
      _
    %s52 = sadd.s32 0, 0
    %p53 = scmp.lt.s32.totalorder %s52, 0
    %s54 = scalar_select %p53, %s52, 0
    %s55 = smul.u32 16, %s54
    %p56 = scmp.lt.s32.totalorder %s55, 15
    %s57 = scalar_select %p56, %s55, 15
    %s58 = scalar_lea.vmem %s1, %s57
    %s59 = sadd.s32 0, 0
    %p60 = scmp.lt.s32.totalorder %s59, 0
    %s61 = scalar_select %p60, %s59, 0
    %s62 = smul.u32 16, %s61
    %s63 = sadd.s32 0, 0
    %p64 = scmp.lt.s32.totalorder %s63, 0
    %s65 = scalar_select %p64, %s63, 0
    %s66 = smul.u32 16, %s65
    %p67 = scmp.lt.s32.totalorder %s66, 15
    %s68 = scalar_select %p67, %s66, 15
    %s69 = scalar_lea.vmem %s1, %s68
    %s70 = sadd.s32 0, 0
    %p71 = scmp.lt.s32.totalorder %s70, 0
    %s72 = scalar_select %p71, %s70, 0
    %s73 = smul.u32 16, %s72
    %s74 = sadd.s32 0, 0
    %p75 = scmp.lt.s32.totalorder %s74, 0
    %s76 = scalar_select %p75, %s74, 0
    %s77 = smul.u32 16, %s76
    %p81 = scmp.eq.s32.totalorder 0, 0
    // Predicated region
    $region22: #{lr_forward.1} parent=1 // pred_check
      %p82 = pneg %p81
    $region23: #{lr_forward.1} parent=1 // pred_check_branch
      %84 = sbr.rel (%p82) target = $region25
    $region24: #{lr_forward.1} parent=1 // pred_region
      %85 = vst [vmem:[%s5] sm:$0xff] 0.0
      %86 = vst [vmem:[%s5 + $0x8] sm:$0xff] 0.0
      %87 = vst [vmem:[%s5 + $0x10] sm:$0xff] 0.0
      %88 = vst [vmem:[%s5 + $0x18] sm:$0xff] 0.0
      %89 = vst [vmem:[%s5 + $0x20] sm:$0xff] 0.0
      %90 = vst [vmem:[%s5 + $0x28] sm:$0xff] 0.0
      %91 = vst [vmem:[%s5 + $0x30] sm:$0xff] 0.0
      %92 = vst [vmem:[%s5 + $0x38] sm:$0xff] 0.0
      %93 = vst [vmem:[%s5 + $0x40] sm:$0xff] 0.0
      %94 = vst [vmem:[%s5 + $0x48] sm:$0xff] 0.0
      %95 = vst [vmem:[%s5 + $0x50] sm:$0xff] 0.0
      %96 = vst [vmem:[%s5 + $0x58] sm:$0xff] 0.0
      %97 = vst [vmem:[%s5 + $0x60] sm:$0xff] 0.0
      %98 = vst [vmem:[%s5 + $0x68] sm:$0xff] 0.0
      %99 = vst [vmem:[%s5 + $0x70] sm:$0xff] 0.0
      %100 = vst [vmem:[%s5 + $0x78] sm:$0xff] 0.0
    $region25: #{lr_forward.1} parent=1 // pred_fallthru
      _
    %v101 = vld [vmem:[#allocation3] sm:$0xff]
    %v102 = vld [vmem:[#allocation3 + $0x8] sm:$0xff]
    %v103 = vld [vmem:[#allocation3 + $0x10] sm:$0xff]
    %v104 = vld [vmem:[#allocation3 + $0x18] sm:$0xff]
    %v105 = vld [vmem:[#allocation3 + $0x20] sm:$0xff]
    %v106 = vld [vmem:[#allocation3 + $0x28] sm:$0xff]
    %v107 = vld [vmem:[#allocation3 + $0x30] sm:$0xff]
    %v108 = vld [vmem:[#allocation3 + $0x38] sm:$0xff]
    %v109 = vld [vmem:[#allocation3 + $0x40] sm:$0xff]
    %v110 = vld [vmem:[#allocation3 + $0x48] sm:$0xff]
    %v111 = vld [vmem:[#allocation3 + $0x50] sm:$0xff]
    %v112 = vld [vmem:[#allocation3 + $0x58] sm:$0xff]
    %v113 = vld [vmem:[#allocation3 + $0x60] sm:$0xff]
    %v114 = vld [vmem:[#allocation3 + $0x68] sm:$0xff]
    %v115 = vld [vmem:[#allocation3 + $0x70] sm:$0xff]
    %v116 = vld [vmem:[#allocation3 + $0x78] sm:$0xff]
    %v117 = vld [vmem:[#allocation3 + $0x80] sm:$0xff]
    %v118 = vld [vmem:[#allocation3 + $0x88] sm:$0xff]
    %v119 = vld [vmem:[#allocation3 + $0x90] sm:$0xff]
    %v120 = vld [vmem:[#allocation3 + $0x98] sm:$0xff]
    %v121 = vld [vmem:[#allocation3 + $0xa0] sm:$0xff]
    %v122 = vld [vmem:[#allocation3 + $0xa8] sm:$0xff]
    %v123 = vld [vmem:[#allocation3 + $0xb0] sm:$0xff]
    %v124 = vld [vmem:[#allocation3 + $0xb8] sm:$0xff]
    %v125 = vld [vmem:[#allocation3 + $0xc0] sm:$0xff]
    %v126 = vld [vmem:[#allocation3 + $0xc8] sm:$0xff]
    %v127 = vld [vmem:[#allocation3 + $0xd0] sm:$0xff]
    %v128 = vld [vmem:[#allocation3 + $0xd8] sm:$0xff]
    %v129 = vld [vmem:[#allocation3 + $0xe0] sm:$0xff]
    %v130 = vld [vmem:[#allocation3 + $0xe8] sm:$0xff]
    %v131 = vld [vmem:[#allocation3 + $0xf0] sm:$0xff]
    %v132 = vld [vmem:[#allocation3 + $0xf8] sm:$0xff]
    %v133 = vld [vmem:[%s2] sm:$0x1]
    %s134 = sld [smem:[#allocation2]]
    %v135 = vstv %s134
    %vm136 = vcmask 130048
    %v138 = vsel %vm136, %v133, 0
    %140 = vmatprep.subr.mxu0 %v102
    %141 = vmatpush1.msra.mxu0 %v101
    %142 = vmatprep.subr.mxu0 %v118
    %143 = vmatpush1.msra.mxu0 %v117
    %144 = vmatprep.subr.mxu0 0.0
    %145 = vmatpush1.msra.mxu0 0.0
    %146 = vmatprep.subr.mxu0 0.0
    %147 = vmatpush1.msra.mxu0 0.0
    %148 = vmatprep.subr.mxu0 0.0
    %149 = vmatpush1.msra.mxu0 0.0
    %150 = vmatprep.subr.mxu0 0.0
    %151 = vmatpush1.msra.mxu0 0.0
    %152 = vmatprep.subr.mxu0 0.0
    %153 = vmatpush1.msra.mxu0 0.0
    %154 = vmatprep.subr.mxu0 0.0
    %155 = vmatpush1.msra.mxu0 0.0
    %156 = vmatprep.subr.mxu0 0.0
    %157 = vmatpush1.msra.mxu0 0.0
    %158 = vmatprep.subr.mxu0 0.0
    %159 = vmatpush1.msra.mxu0 0.0
    %160 = vmatprep.subr.mxu0 0.0
    %161 = vmatpush1.msra.mxu0 0.0
    %162 = vmatprep.subr.mxu0 0.0
    %163 = vmatpush1.msra.mxu0 0.0
    %164 = vmatprep.subr.mxu0 0.0
    %165 = vmatpush1.msra.mxu0 0.0
    %166 = vmatprep.subr.mxu0 0.0
    %167 = vmatpush1.msra.mxu0 0.0
    %168 = vmatprep.subr.mxu0 0.0
    %169 = vmatpush1.msra.mxu0 0.0
    %170 = vmatprep.subr.mxu0 0.0
    %171 = vmatpush1.msra.mxu0 0.0
    %172 = vmatprep.subr.mxu0 0.0
    %173 = vmatpush1.msra.mxu0 0.0
    %174 = vmatprep.subr.mxu0 0.0
    %175 = vmatpush1.msra.mxu0 0.0
    %176 = vmatprep.subr.mxu0 0.0
    %177 = vmatpush1.msra.mxu0 0.0
    %178 = vmatprep.subr.mxu0 0.0
    %179 = vmatpush1.msra.mxu0 0.0
    %180 = vmatprep.subr.mxu0 0.0
    %181 = vmatpush1.msra.mxu0 0.0
    %182 = vmatprep.subr.mxu0 0.0
    %183 = vmatpush1.msra.mxu0 0.0
    %184 = vmatprep.subr.mxu0 0.0
    %185 = vmatpush1.msra.mxu0 0.0
    %186 = vmatprep.subr.mxu0 0.0
    %187 = vmatpush1.msra.mxu0 0.0
    %188 = vmatprep.subr.mxu0 0.0
    %189 = vmatpush1.msra.mxu0 0.0
    %190 = vmatprep.subr.mxu0 0.0
    %191 = vmatpush1.msra.mxu0 0.0
    %192 = vmatprep.subr.mxu0 0.0
    %193 = vmatpush1.msra.mxu0 0.0
    %194 = vmatprep.subr.mxu0 0.0
    %195 = vmatpush1.msra.mxu0 0.0
    %196 = vmatprep.subr.mxu0 0.0
    %197 = vmatpush1.msra.mxu0 0.0
    %198 = vmatprep.subr.mxu0 0.0
    %199 = vmatpush1.msra.mxu0 0.0
    %200 = vmatprep.subr.mxu0 0.0
    %201 = vmatpush1.msra.mxu0 0.0
    %202 = vmatprep.subr.mxu0 0.0
    %203 = vmatpush1.msra.mxu0 0.0
    %204 = vmatprep.mubr.f32.mxu0 0.0
    %205 = vmatmul.mubr.f32.gmra.mrb[0].mxu0 %v138
    %v206 = vpop.f32.mrb[0].mxu0
    %v207 = vadd.f32 %v135, %v206
    %v208 = vpop.f32.mrb[0].mxu0
    %v209 = vadd.f32 %v135, %v208
    %210 = vdwg.mxu0
    %211 = vmatprep.subr.mxu0 %v104
    %212 = vmatpush1.msra.mxu0 %v103
    %213 = vmatprep.subr.mxu0 %v120
    %214 = vmatpush1.msra.mxu0 %v119
    %215 = vmatprep.subr.mxu0 0.0
    %216 = vmatpush1.msra.mxu0 0.0
    %217 = vmatprep.subr.mxu0 0.0
    %218 = vmatpush1.msra.mxu0 0.0
    %219 = vmatprep.subr.mxu0 0.0
    %220 = vmatpush1.msra.mxu0 0.0
    %221 = vmatprep.subr.mxu0 0.0
    %222 = vmatpush1.msra.mxu0 0.0
    %223 = vmatprep.subr.mxu0 0.0
    %224 = vmatpush1.msra.mxu0 0.0
    %225 = vmatprep.subr.mxu0 0.0
    %226 = vmatpush1.msra.mxu0 0.0
    %227 = vmatprep.subr.mxu0 0.0
    %228 = vmatpush1.msra.mxu0 0.0
    %229 = vmatprep.subr.mxu0 0.0
    %230 = vmatpush1.msra.mxu0 0.0
    %231 = vmatprep.subr.mxu0 0.0
    %232 = vmatpush1.msra.mxu0 0.0
    %233 = vmatprep.subr.mxu0 0.0
    %234 = vmatpush1.msra.mxu0 0.0
    %235 = vmatprep.subr.mxu0 0.0
    %236 = vmatpush1.msra.mxu0 0.0
    %237 = vmatprep.subr.mxu0 0.0
    %238 = vmatpush1.msra.mxu0 0.0
    %239 = vmatprep.subr.mxu0 0.0
    %240 = vmatpush1.msra.mxu0 0.0
    %241 = vmatprep.subr.mxu0 0.0
    %242 = vmatpush1.msra.mxu0 0.0
    %243 = vmatprep.subr.mxu0 0.0
    %244 = vmatpush1.msra.mxu0 0.0
    %245 = vmatprep.subr.mxu0 0.0
    %246 = vmatpush1.msra.mxu0 0.0
    %247 = vmatprep.subr.mxu0 0.0
    %248 = vmatpush1.msra.mxu0 0.0
    %249 = vmatprep.subr.mxu0 0.0
    %250 = vmatpush1.msra.mxu0 0.0
    %251 = vmatprep.subr.mxu0 0.0
    %252 = vmatpush1.msra.mxu0 0.0
    %253 = vmatprep.subr.mxu0 0.0
    %254 = vmatpush1.msra.mxu0 0.0
    %255 = vmatprep.subr.mxu0 0.0
    %256 = vmatpush1.msra.mxu0 0.0
    %257 = vmatprep.subr.mxu0 0.0
    %258 = vmatpush1.msra.mxu0 0.0
    %259 = vmatprep.subr.mxu0 0.0
    %260 = vmatpush1.msra.mxu0 0.0
    %261 = vmatprep.subr.mxu0 0.0
    %262 = vmatpush1.msra.mxu0 0.0
    %263 = vmatprep.subr.mxu0 0.0
    %264 = vmatpush1.msra.mxu0 0.0
    %265 = vmatprep.subr.mxu0 0.0
    %266 = vmatpush1.msra.mxu0 0.0
    %267 = vmatprep.subr.mxu0 0.0
    %268 = vmatpush1.msra.mxu0 0.0
    %269 = vmatprep.subr.mxu0 0.0
    %270 = vmatpush1.msra.mxu0 0.0
    %271 = vmatprep.subr.mxu0 0.0
    %272 = vmatpush1.msra.mxu0 0.0
    %273 = vmatprep.subr.mxu0 0.0
    %274 = vmatpush1.msra.mxu0 0.0
    %275 = vmatprep.mubr.f32.mxu0 0.0
    %276 = vmatmul.mubr.f32.gmra.mrb[0].mxu0 %v138
    %v277 = vpop.f32.mrb[0].mxu0
    %v278 = vadd.f32 %v135, %v277
    %v279 = vpop.f32.mrb[0].mxu0
    %v280 = vadd.f32 %v135, %v279
    %281 = vdwg.mxu0
    %282 = vmatprep.subr.mxu0 %v106
    %283 = vmatpush1.msra.mxu0 %v105
    %284 = vmatprep.subr.mxu0 %v122
    %285 = vmatpush1.msra.mxu0 %v121
    %286 = vmatprep.subr.mxu0 0.0
    %287 = vmatpush1.msra.mxu0 0.0
    %288 = vmatprep.subr.mxu0 0.0
    %289 = vmatpush1.msra.mxu0 0.0
    %290 = vmatprep.subr.mxu0 0.0
    %291 = vmatpush1.msra.mxu0 0.0
    %292 = vmatprep.subr.mxu0 0.0
    %293 = vmatpush1.msra.mxu0 0.0
    %294 = vmatprep.subr.mxu0 0.0
    %295 = vmatpush1.msra.mxu0 0.0
    %296 = vmatprep.subr.mxu0 0.0
    %297 = vmatpush1.msra.mxu0 0.0
    %298 = vmatprep.subr.mxu0 0.0
    %299 = vmatpush1.msra.mxu0 0.0
    %300 = vmatprep.subr.mxu0 0.0
    %301 = vmatpush1.msra.mxu0 0.0
    %302 = vmatprep.subr.mxu0 0.0
    %303 = vmatpush1.msra.mxu0 0.0
    %304 = vmatprep.subr.mxu0 0.0
    %305 = vmatpush1.msra.mxu0 0.0
    %306 = vmatprep.subr.mxu0 0.0
    %307 = vmatpush1.msra.mxu0 0.0
    %308 = vmatprep.subr.mxu0 0.0
    %309 = vmatpush1.msra.mxu0 0.0
    %310 = vmatprep.subr.mxu0 0.0
    %311 = vmatpush1.msra.mxu0 0.0
    %312 = vmatprep.subr.mxu0 0.0
    %313 = vmatpush1.msra.mxu0 0.0
    %314 = vmatprep.subr.mxu0 0.0
    %315 = vmatpush1.msra.mxu0 0.0
    %316 = vmatprep.subr.mxu0 0.0
    %317 = vmatpush1.msra.mxu0 0.0
    %318 = vmatprep.subr.mxu0 0.0
    %319 = vmatpush1.msra.mxu0 0.0
    %320 = vmatprep.subr.mxu0 0.0
    %321 = vmatpush1.msra.mxu0 0.0
    %322 = vmatprep.subr.mxu0 0.0
    %323 = vmatpush1.msra.mxu0 0.0
    %324 = vmatprep.subr.mxu0 0.0
    %325 = vmatpush1.msra.mxu0 0.0
    %326 = vmatprep.subr.mxu0 0.0
    %327 = vmatpush1.msra.mxu0 0.0
    %328 = vmatprep.subr.mxu0 0.0
    %329 = vmatpush1.msra.mxu0 0.0
    %330 = vmatprep.subr.mxu0 0.0
    %331 = vmatpush1.msra.mxu0 0.0
    %332 = vmatprep.subr.mxu0 0.0
    %333 = vmatpush1.msra.mxu0 0.0
    %334 = vmatprep.subr.mxu0 0.0
    %335 = vmatpush1.msra.mxu0 0.0
    %336 = vmatprep.subr.mxu0 0.0
    %337 = vmatpush1.msra.mxu0 0.0
    %338 = vmatprep.subr.mxu0 0.0
    %339 = vmatpush1.msra.mxu0 0.0
    %340 = vmatprep.subr.mxu0 0.0
    %341 = vmatpush1.msra.mxu0 0.0
    %342 = vmatprep.subr.mxu0 0.0
    %343 = vmatpush1.msra.mxu0 0.0
    %344 = vmatprep.subr.mxu0 0.0
    %345 = vmatpush1.msra.mxu0 0.0
    %346 = vmatprep.mubr.f32.mxu0 0.0
    %347 = vmatmul.mubr.f32.gmra.mrb[0].mxu0 %v138
    %v348 = vpop.f32.mrb[0].mxu0
    %v349 = vadd.f32 %v135, %v348
    %v350 = vpop.f32.mrb[0].mxu0
    %v351 = vadd.f32 %v135, %v350
    %352 = vdwg.mxu0
    %353 = vmatprep.subr.mxu0 %v108
    %354 = vmatpush1.msra.mxu0 %v107
    %355 = vmatprep.subr.mxu0 %v124
    %356 = vmatpush1.msra.mxu0 %v123
    %357 = vmatprep.subr.mxu0 0.0
    %358 = vmatpush1.msra.mxu0 0.0
    %359 = vmatprep.subr.mxu0 0.0
    %360 = vmatpush1.msra.mxu0 0.0
    %361 = vmatprep.subr.mxu0 0.0
    %362 = vmatpush1.msra.mxu0 0.0
    %363 = vmatprep.subr.mxu0 0.0
    %364 = vmatpush1.msra.mxu0 0.0
    %365 = vmatprep.subr.mxu0 0.0
    %366 = vmatpush1.msra.mxu0 0.0
    %367 = vmatprep.subr.mxu0 0.0
    %368 = vmatpush1.msra.mxu0 0.0
    %369 = vmatprep.subr.mxu0 0.0
    %370 = vmatpush1.msra.mxu0 0.0
    %371 = vmatprep.subr.mxu0 0.0
    %372 = vmatpush1.msra.mxu0 0.0
    %373 = vmatprep.subr.mxu0 0.0
    %374 = vmatpush1.msra.mxu0 0.0
    %375 = vmatprep.subr.mxu0 0.0
    %376 = vmatpush1.msra.mxu0 0.0
    %377 = vmatprep.subr.mxu0 0.0
    %378 = vmatpush1.msra.mxu0 0.0
    %379 = vmatprep.subr.mxu0 0.0
    %380 = vmatpush1.msra.mxu0 0.0
    %381 = vmatprep.subr.mxu0 0.0
    %382 = vmatpush1.msra.mxu0 0.0
    %383 = vmatprep.subr.mxu0 0.0
    %384 = vmatpush1.msra.mxu0 0.0
    %385 = vmatprep.subr.mxu0 0.0
    %386 = vmatpush1.msra.mxu0 0.0
    %387 = vmatprep.subr.mxu0 0.0
    %388 = vmatpush1.msra.mxu0 0.0
    %389 = vmatprep.subr.mxu0 0.0
    %390 = vmatpush1.msra.mxu0 0.0
    %391 = vmatprep.subr.mxu0 0.0
    %392 = vmatpush1.msra.mxu0 0.0
    %393 = vmatprep.subr.mxu0 0.0
    %394 = vmatpush1.msra.mxu0 0.0
    %395 = vmatprep.subr.mxu0 0.0
    %396 = vmatpush1.msra.mxu0 0.0
    %397 = vmatprep.subr.mxu0 0.0
    %398 = vmatpush1.msra.mxu0 0.0
    %399 = vmatprep.subr.mxu0 0.0
    %400 = vmatpush1.msra.mxu0 0.0
    %401 = vmatprep.subr.mxu0 0.0
    %402 = vmatpush1.msra.mxu0 0.0
    %403 = vmatprep.subr.mxu0 0.0
    %404 = vmatpush1.msra.mxu0 0.0
    %405 = vmatprep.subr.mxu0 0.0
    %406 = vmatpush1.msra.mxu0 0.0
    %407 = vmatprep.subr.mxu0 0.0
    %408 = vmatpush1.msra.mxu0 0.0
    %409 = vmatprep.subr.mxu0 0.0
    %410 = vmatpush1.msra.mxu0 0.0
    %411 = vmatprep.subr.mxu0 0.0
    %412 = vmatpush1.msra.mxu0 0.0
    %413 = vmatprep.subr.mxu0 0.0
    %414 = vmatpush1.msra.mxu0 0.0
    %415 = vmatprep.subr.mxu0 0.0
    %416 = vmatpush1.msra.mxu0 0.0
    %417 = vmatprep.mubr.f32.mxu0 0.0
    %418 = vmatmul.mubr.f32.gmra.mrb[0].mxu0 %v138
    %v419 = vpop.f32.mrb[0].mxu0
    %v420 = vadd.f32 %v135, %v419
    %v421 = vpop.f32.mrb[0].mxu0
    %v422 = vadd.f32 %v135, %v421
    %423 = vdwg.mxu0
    %424 = vmatprep.subr.mxu0 %v110
    %425 = vmatpush1.msra.mxu0 %v109
    %426 = vmatprep.subr.mxu0 %v126
    %427 = vmatpush1.msra.mxu0 %v125
    %428 = vmatprep.subr.mxu0 0.0
    %429 = vmatpush1.msra.mxu0 0.0
    %430 = vmatprep.subr.mxu0 0.0
    %431 = vmatpush1.msra.mxu0 0.0
    %432 = vmatprep.subr.mxu0 0.0
    %433 = vmatpush1.msra.mxu0 0.0
    %434 = vmatprep.subr.mxu0 0.0
    %435 = vmatpush1.msra.mxu0 0.0
    %436 = vmatprep.subr.mxu0 0.0
    %437 = vmatpush1.msra.mxu0 0.0
    %438 = vmatprep.subr.mxu0 0.0
    %439 = vmatpush1.msra.mxu0 0.0
    %440 = vmatprep.subr.mxu0 0.0
    %441 = vmatpush1.msra.mxu0 0.0
    %442 = vmatprep.subr.mxu0 0.0
    %443 = vmatpush1.msra.mxu0 0.0
    %444 = vmatprep.subr.mxu0 0.0
    %445 = vmatpush1.msra.mxu0 0.0
    %446 = vmatprep.subr.mxu0 0.0
    %447 = vmatpush1.msra.mxu0 0.0
    %448 = vmatprep.subr.mxu0 0.0
    %449 = vmatpush1.msra.mxu0 0.0
    %450 = vmatprep.subr.mxu0 0.0
    %451 = vmatpush1.msra.mxu0 0.0
    %452 = vmatprep.subr.mxu0 0.0
    %453 = vmatpush1.msra.mxu0 0.0
    %454 = vmatprep.subr.mxu0 0.0
    %455 = vmatpush1.msra.mxu0 0.0
    %456 = vmatprep.subr.mxu0 0.0
    %457 = vmatpush1.msra.mxu0 0.0
    %458 = vmatprep.subr.mxu0 0.0
    %459 = vmatpush1.msra.mxu0 0.0
    %460 = vmatprep.subr.mxu0 0.0
    %461 = vmatpush1.msra.mxu0 0.0
    %462 = vmatprep.subr.mxu0 0.0
    %463 = vmatpush1.msra.mxu0 0.0
    %464 = vmatprep.subr.mxu0 0.0
    %465 = vmatpush1.msra.mxu0 0.0
    %466 = vmatprep.subr.mxu0 0.0
    %467 = vmatpush1.msra.mxu0 0.0
    %468 = vmatprep.subr.mxu0 0.0
    %469 = vmatpush1.msra.mxu0 0.0
    %470 = vmatprep.subr.mxu0 0.0
    %471 = vmatpush1.msra.mxu0 0.0
    %472 = vmatprep.subr.mxu0 0.0
    %473 = vmatpush1.msra.mxu0 0.0
    %474 = vmatprep.subr.mxu0 0.0
    %475 = vmatpush1.msra.mxu0 0.0
    %476 = vmatprep.subr.mxu0 0.0
    %477 = vmatpush1.msra.mxu0 0.0
    %478 = vmatprep.subr.mxu0 0.0
    %479 = vmatpush1.msra.mxu0 0.0
    %480 = vmatprep.subr.mxu0 0.0
    %481 = vmatpush1.msra.mxu0 0.0
    %482 = vmatprep.subr.mxu0 0.0
    %483 = vmatpush1.msra.mxu0 0.0
    %484 = vmatprep.subr.mxu0 0.0
    %485 = vmatpush1.msra.mxu0 0.0
    %486 = vmatprep.subr.mxu0 0.0
    %487 = vmatpush1.msra.mxu0 0.0
    %488 = vmatprep.mubr.f32.mxu0 0.0
    %489 = vmatmul.mubr.f32.gmra.mrb[0].mxu0 %v138
    %v490 = vpop.f32.mrb[0].mxu0
    %v491 = vadd.f32 %v135, %v490
    %v492 = vpop.f32.mrb[0].mxu0
    %v493 = vadd.f32 %v135, %v492
    %494 = vdwg.mxu0
    %495 = vmatprep.subr.mxu0 %v112
    %496 = vmatpush1.msra.mxu0 %v111
    %497 = vmatprep.subr.mxu0 %v128
    %498 = vmatpush1.msra.mxu0 %v127
    %499 = vmatprep.subr.mxu0 0.0
    %500 = vmatpush1.msra.mxu0 0.0
    %501 = vmatprep.subr.mxu0 0.0
    %502 = vmatpush1.msra.mxu0 0.0
    %503 = vmatprep.subr.mxu0 0.0
    %504 = vmatpush1.msra.mxu0 0.0
    %505 = vmatprep.subr.mxu0 0.0
    %506 = vmatpush1.msra.mxu0 0.0
    %507 = vmatprep.subr.mxu0 0.0
    %508 = vmatpush1.msra.mxu0 0.0
    %509 = vmatprep.subr.mxu0 0.0
    %510 = vmatpush1.msra.mxu0 0.0
    %511 = vmatprep.subr.mxu0 0.0
    %512 = vmatpush1.msra.mxu0 0.0
    %513 = vmatprep.subr.mxu0 0.0
    %514 = vmatpush1.msra.mxu0 0.0
    %515 = vmatprep.subr.mxu0 0.0
    %516 = vmatpush1.msra.mxu0 0.0
    %517 = vmatprep.subr.mxu0 0.0
    %518 = vmatpush1.msra.mxu0 0.0
    %519 = vmatprep.subr.mxu0 0.0
    %520 = vmatpush1.msra.mxu0 0.0
    %521 = vmatprep.subr.mxu0 0.0
    %522 = vmatpush1.msra.mxu0 0.0
    %523 = vmatprep.subr.mxu0 0.0
    %524 = vmatpush1.msra.mxu0 0.0
    %525 = vmatprep.subr.mxu0 0.0
    %526 = vmatpush1.msra.mxu0 0.0
    %527 = vmatprep.subr.mxu0 0.0
    %528 = vmatpush1.msra.mxu0 0.0
    %529 = vmatprep.subr.mxu0 0.0
    %530 = vmatpush1.msra.mxu0 0.0
    %531 = vmatprep.subr.mxu0 0.0
    %532 = vmatpush1.msra.mxu0 0.0
    %533 = vmatprep.subr.mxu0 0.0
    %534 = vmatpush1.msra.mxu0 0.0
    %535 = vmatprep.subr.mxu0 0.0
    %536 = vmatpush1.msra.mxu0 0.0
    %537 = vmatprep.subr.mxu0 0.0
    %538 = vmatpush1.msra.mxu0 0.0
    %539 = vmatprep.subr.mxu0 0.0
    %540 = vmatpush1.msra.mxu0 0.0
    %541 = vmatprep.subr.mxu0 0.0
    %542 = vmatpush1.msra.mxu0 0.0
    %543 = vmatprep.subr.mxu0 0.0
    %544 = vmatpush1.msra.mxu0 0.0
    %545 = vmatprep.subr.mxu0 0.0
    %546 = vmatpush1.msra.mxu0 0.0
    %547 = vmatprep.subr.mxu0 0.0
    %548 = vmatpush1.msra.mxu0 0.0
    %549 = vmatprep.subr.mxu0 0.0
    %550 = vmatpush1.msra.mxu0 0.0
    %551 = vmatprep.subr.mxu0 0.0
    %552 = vmatpush1.msra.mxu0 0.0
    %553 = vmatprep.subr.mxu0 0.0
    %554 = vmatpush1.msra.mxu0 0.0
    %555 = vmatprep.subr.mxu0 0.0
    %556 = vmatpush1.msra.mxu0 0.0
    %557 = vmatprep.subr.mxu0 0.0
    %558 = vmatpush1.msra.mxu0 0.0
    %559 = vmatprep.mubr.f32.mxu0 0.0
    %560 = vmatmul.mubr.f32.gmra.mrb[0].mxu0 %v138
    %v561 = vpop.f32.mrb[0].mxu0
    %v562 = vadd.f32 %v135, %v561
    %v563 = vpop.f32.mrb[0].mxu0
    %v564 = vadd.f32 %v135, %v563
    %565 = vdwg.mxu0
    %566 = vmatprep.subr.mxu0 %v114
    %567 = vmatpush1.msra.mxu0 %v113
    %568 = vmatprep.subr.mxu0 %v130
    %569 = vmatpush1.msra.mxu0 %v129
    %570 = vmatprep.subr.mxu0 0.0
    %571 = vmatpush1.msra.mxu0 0.0
    %572 = vmatprep.subr.mxu0 0.0
    %573 = vmatpush1.msra.mxu0 0.0
    %574 = vmatprep.subr.mxu0 0.0
    %575 = vmatpush1.msra.mxu0 0.0
    %576 = vmatprep.subr.mxu0 0.0
    %577 = vmatpush1.msra.mxu0 0.0
    %578 = vmatprep.subr.mxu0 0.0
    %579 = vmatpush1.msra.mxu0 0.0
    %580 = vmatprep.subr.mxu0 0.0
    %581 = vmatpush1.msra.mxu0 0.0
    %582 = vmatprep.subr.mxu0 0.0
    %583 = vmatpush1.msra.mxu0 0.0
    %584 = vmatprep.subr.mxu0 0.0
    %585 = vmatpush1.msra.mxu0 0.0
    %586 = vmatprep.subr.mxu0 0.0
    %587 = vmatpush1.msra.mxu0 0.0
    %588 = vmatprep.subr.mxu0 0.0
    %589 = vmatpush1.msra.mxu0 0.0
    %590 = vmatprep.subr.mxu0 0.0
    %591 = vmatpush1.msra.mxu0 0.0
    %592 = vmatprep.subr.mxu0 0.0
    %593 = vmatpush1.msra.mxu0 0.0
    %594 = vmatprep.subr.mxu0 0.0
    %595 = vmatpush1.msra.mxu0 0.0
    %596 = vmatprep.subr.mxu0 0.0
    %597 = vmatpush1.msra.mxu0 0.0
    %598 = vmatprep.subr.mxu0 0.0
    %599 = vmatpush1.msra.mxu0 0.0
    %600 = vmatprep.subr.mxu0 0.0
    %601 = vmatpush1.msra.mxu0 0.0
    %602 = vmatprep.subr.mxu0 0.0
    %603 = vmatpush1.msra.mxu0 0.0
    %604 = vmatprep.subr.mxu0 0.0
    %605 = vmatpush1.msra.mxu0 0.0
    %606 = vmatprep.subr.mxu0 0.0
    %607 = vmatpush1.msra.mxu0 0.0
    %608 = vmatprep.subr.mxu0 0.0
    %609 = vmatpush1.msra.mxu0 0.0
    %610 = vmatprep.subr.mxu0 0.0
    %611 = vmatpush1.msra.mxu0 0.0
    %612 = vmatprep.subr.mxu0 0.0
    %613 = vmatpush1.msra.mxu0 0.0
    %614 = vmatprep.subr.mxu0 0.0
    %615 = vmatpush1.msra.mxu0 0.0
    %616 = vmatprep.subr.mxu0 0.0
    %617 = vmatpush1.msra.mxu0 0.0
    %618 = vmatprep.subr.mxu0 0.0
    %619 = vmatpush1.msra.mxu0 0.0
    %620 = vmatprep.subr.mxu0 0.0
    %621 = vmatpush1.msra.mxu0 0.0
    %622 = vmatprep.subr.mxu0 0.0
    %623 = vmatpush1.msra.mxu0 0.0
    %624 = vmatprep.subr.mxu0 0.0
    %625 = vmatpush1.msra.mxu0 0.0
    %626 = vmatprep.subr.mxu0 0.0
    %627 = vmatpush1.msra.mxu0 0.0
    %628 = vmatprep.subr.mxu0 0.0
    %629 = vmatpush1.msra.mxu0 0.0
    %630 = vmatprep.mubr.f32.mxu0 0.0
    %631 = vmatmul.mubr.f32.gmra.mrb[0].mxu0 %v138
    %v632 = vpop.f32.mrb[0].mxu0
    %v633 = vadd.f32 %v135, %v632
    %v634 = vpop.f32.mrb[0].mxu0
    %v635 = vadd.f32 %v135, %v634
    %636 = vdwg.mxu0
    %637 = vmatprep.subr.mxu0 %v116
    %638 = vmatpush1.msra.mxu0 %v115
    %639 = vmatprep.subr.mxu0 %v132
    %640 = vmatpush1.msra.mxu0 %v131
    %641 = vmatprep.subr.mxu0 0.0
    %642 = vmatpush1.msra.mxu0 0.0
    %643 = vmatprep.subr.mxu0 0.0
    %644 = vmatpush1.msra.mxu0 0.0
    %645 = vmatprep.subr.mxu0 0.0
    %646 = vmatpush1.msra.mxu0 0.0
    %647 = vmatprep.subr.mxu0 0.0
    %648 = vmatpush1.msra.mxu0 0.0
    %649 = vmatprep.subr.mxu0 0.0
    %650 = vmatpush1.msra.mxu0 0.0
    %651 = vmatprep.subr.mxu0 0.0
    %652 = vmatpush1.msra.mxu0 0.0
    %653 = vmatprep.subr.mxu0 0.0
    %654 = vmatpush1.msra.mxu0 0.0
    %655 = vmatprep.subr.mxu0 0.0
    %656 = vmatpush1.msra.mxu0 0.0
    %657 = vmatprep.subr.mxu0 0.0
    %658 = vmatpush1.msra.mxu0 0.0
    %659 = vmatprep.subr.mxu0 0.0
    %660 = vmatpush1.msra.mxu0 0.0
    %661 = vmatprep.subr.mxu0 0.0
    %662 = vmatpush1.msra.mxu0 0.0
    %663 = vmatprep.subr.mxu0 0.0
    %664 = vmatpush1.msra.mxu0 0.0
    %665 = vmatprep.subr.mxu0 0.0
    %666 = vmatpush1.msra.mxu0 0.0
    %667 = vmatprep.subr.mxu0 0.0
    %668 = vmatpush1.msra.mxu0 0.0
    %669 = vmatprep.subr.mxu0 0.0
    %670 = vmatpush1.msra.mxu0 0.0
    %671 = vmatprep.subr.mxu0 0.0
    %672 = vmatpush1.msra.mxu0 0.0
    %673 = vmatprep.subr.mxu0 0.0
    %674 = vmatpush1.msra.mxu0 0.0
    %675 = vmatprep.subr.mxu0 0.0
    %676 = vmatpush1.msra.mxu0 0.0
    %677 = vmatprep.subr.mxu0 0.0
    %678 = vmatpush1.msra.mxu0 0.0
    %679 = vmatprep.subr.mxu0 0.0
    %680 = vmatpush1.msra.mxu0 0.0
    %681 = vmatprep.subr.mxu0 0.0
    %682 = vmatpush1.msra.mxu0 0.0
    %683 = vmatprep.subr.mxu0 0.0
    %684 = vmatpush1.msra.mxu0 0.0
    %685 = vmatprep.subr.mxu0 0.0
    %686 = vmatpush1.msra.mxu0 0.0
    %687 = vmatprep.subr.mxu0 0.0
    %688 = vmatpush1.msra.mxu0 0.0
    %689 = vmatprep.subr.mxu0 0.0
    %690 = vmatpush1.msra.mxu0 0.0
    %691 = vmatprep.subr.mxu0 0.0
    %692 = vmatpush1.msra.mxu0 0.0
    %693 = vmatprep.subr.mxu0 0.0
    %694 = vmatpush1.msra.mxu0 0.0
    %695 = vmatprep.subr.mxu0 0.0
    %696 = vmatpush1.msra.mxu0 0.0
    %697 = vmatprep.subr.mxu0 0.0
    %698 = vmatpush1.msra.mxu0 0.0
    %699 = vmatprep.subr.mxu0 0.0
    %700 = vmatpush1.msra.mxu0 0.0
    %701 = vmatprep.mubr.f32.mxu0 0.0
    %702 = vmatmul.mubr.f32.gmra.mrb[0].mxu0 %v138
    %v703 = vpop.f32.mrb[0].mxu0
    %v704 = vadd.f32 %v135, %v703
    %v705 = vpop.f32.mrb[0].mxu0
    %v706 = vadd.f32 %v135, %v705
    %707 = vdwg.mxu0
    %v708 = vxor.u32 %v207, 2147483648
    %v709 = vxor.u32 %v209, 2147483648
    %v710 = vxor.u32 %v278, 2147483648
    %v711 = vxor.u32 %v280, 2147483648
    %v712 = vxor.u32 %v349, 2147483648
    %v713 = vxor.u32 %v351, 2147483648
    %v714 = vxor.u32 %v420, 2147483648
    %v715 = vxor.u32 %v422, 2147483648
    %v716 = vxor.u32 %v491, 2147483648
    %v717 = vxor.u32 %v493, 2147483648
    %v718 = vxor.u32 %v562, 2147483648
    %v719 = vxor.u32 %v564, 2147483648
    %v720 = vxor.u32 %v633, 2147483648
    %v721 = vxor.u32 %v635, 2147483648
    %v722 = vxor.u32 %v704, 2147483648
    %v723 = vxor.u32 %v706, 2147483648
    %v724 = vmul.f32 %v708, 1.442695
    %v725 = vpow.pop %v724
    %v726 = vmul.f32 %v709, 1.442695
    %v727 = vpow.pop %v726
    %v728 = vmul.f32 %v710, 1.442695
    %v729 = vpow.pop %v728
    %v730 = vmul.f32 %v711, 1.442695
    %v731 = vpow.pop %v730
    %v732 = vmul.f32 %v712, 1.442695
    %v733 = vpow.pop %v732
    %v734 = vmul.f32 %v713, 1.442695
    %v735 = vpow.pop %v734
    %v736 = vmul.f32 %v714, 1.442695
    %v737 = vpow.pop %v736
    %v738 = vmul.f32 %v715, 1.442695
    %v739 = vpow.pop %v738
    %v740 = vmul.f32 %v716, 1.442695
    %v741 = vpow.pop %v740
    %v742 = vmul.f32 %v717, 1.442695
    %v743 = vpow.pop %v742
    %v744 = vmul.f32 %v718, 1.442695
    %v745 = vpow.pop %v744
    %v746 = vmul.f32 %v719, 1.442695
    %v747 = vpow.pop %v746
    %v748 = vmul.f32 %v720, 1.442695
    %v749 = vpow.pop %v748
    %v750 = vmul.f32 %v721, 1.442695
    %v751 = vpow.pop %v750
    %v752 = vmul.f32 %v722, 1.442695
    %v753 = vpow.pop %v752
    %v754 = vmul.f32 %v723, 1.442695
    %v755 = vpow.pop %v754
    %v756 = vadd.f32 %v725, 1.0
    %v757 = vadd.f32 %v727, 1.0
    %v758 = vadd.f32 %v729, 1.0
    %v759 = vadd.f32 %v731, 1.0
    %v760 = vadd.f32 %v733, 1.0
    %v761 = vadd.f32 %v735, 1.0
    %v762 = vadd.f32 %v737, 1.0
    %v763 = vadd.f32 %v739, 1.0
    %v764 = vadd.f32 %v741, 1.0
    %v765 = vadd.f32 %v743, 1.0
    %v766 = vadd.f32 %v745, 1.0
    %v767 = vadd.f32 %v747, 1.0
    %v768 = vadd.f32 %v749, 1.0
    %v769 = vadd.f32 %v751, 1.0
    %v770 = vadd.f32 %v753, 1.0
    %v771 = vadd.f32 %v755, 1.0
    %v772 = vrcp.pop %v756
    %v773 = vmul.f32 1.0, %v772
    %v774 = vrcp.pop %v757
    %v775 = vmul.f32 1.0, %v774
    %v776 = vrcp.pop %v758
    %v777 = vmul.f32 1.0, %v776
    %v778 = vrcp.pop %v759
    %v779 = vmul.f32 1.0, %v778
    %v780 = vrcp.pop %v760
    %v781 = vmul.f32 1.0, %v780
    %v782 = vrcp.pop %v761
    %v783 = vmul.f32 1.0, %v782
    %v784 = vrcp.pop %v762
    %v785 = vmul.f32 1.0, %v784
    %v786 = vrcp.pop %v763
    %v787 = vmul.f32 1.0, %v786
    %v788 = vrcp.pop %v764
    %v789 = vmul.f32 1.0, %v788
    %v790 = vrcp.pop %v765
    %v791 = vmul.f32 1.0, %v790
    %v792 = vrcp.pop %v766
    %v793 = vmul.f32 1.0, %v792
    %v794 = vrcp.pop %v767
    %v795 = vmul.f32 1.0, %v794
    %v796 = vrcp.pop %v768
    %v797 = vmul.f32 1.0, %v796
    %v798 = vrcp.pop %v769
    %v799 = vmul.f32 1.0, %v798
    %v800 = vrcp.pop %v770
    %v801 = vmul.f32 1.0, %v800
    %v802 = vrcp.pop %v771
    %v803 = vmul.f32 1.0, %v802
    %v820 = vcombine.low %v773, %v775
    %v821 = vcombine.low %v777, %v779
    %v822 = vcombine.low %v781, %v783
    %v823 = vcombine.low %v785, %v787
    %v825 = vunpack.c.l.s4 1966171168
    %v826 = vunpack.c.0.s8 %v825
    %v827 = vlaneseq
    %v828 = vshrl.u32 %v827, 7
    %v829 = vsub.s32 %v826, %v828
    %v830 = vrot.slane %v820, %v829
    %v832 = vunpack.c.l.s4 1966171168
    %v833 = vunpack.c.0.s8 %v832
    %v834 = vlaneseq
    %v835 = vshrl.u32 %v834, 7
    %v836 = vsub.s32 %v833, %v835
    %v837 = vrot.slane %v821, %v836
    %v839 = vunpack.c.l.s4 1966171168
    %v840 = vunpack.c.0.s8 %v839
    %v841 = vlaneseq
    %v842 = vshrl.u32 %v841, 7
    %v843 = vsub.s32 %v840, %v842
    %v844 = vrot.slane %v822, %v843
    %v846 = vunpack.c.l.s4 1966171168
    %v847 = vunpack.c.0.s8 %v846
    %v848 = vlaneseq
    %v849 = vshrl.u32 %v848, 7
    %v850 = vsub.s32 %v847, %v849
    %v851 = vrot.slane %v823, %v850
    %v852 = vcombine.low %v830, %v837
    %v853 = vcombine.low %v844, %v851
    %v855 = vunpack.c.l.s4 1966171168
    %v856 = vunpack.c.0.s8 %v855
    %v857 = vlaneseq
    %v858 = vshrl.u32 %v857, 7
    %v859 = vsub.s32 %v856, %v858
    %v860 = vrot.slane %v852, %v859
    %v862 = vunpack.c.l.s4 1966171168
    %v863 = vunpack.c.0.s8 %v862
    %v864 = vlaneseq
    %v865 = vshrl.u32 %v864, 7
    %v866 = vsub.s32 %v863, %v865
    %v867 = vrot.slane %v853, %v866
    %v868 = vcombine.low %v860, %v867
    %v869 = vcombine.low %v789, %v791
    %v870 = vcombine.low %v793, %v795
    %v871 = vcombine.low %v797, %v799
    %v872 = vcombine.low %v801, %v803
    %v874 = vunpack.c.l.s4 1966171168
    %v875 = vunpack.c.0.s8 %v874
    %v876 = vlaneseq
    %v877 = vshrl.u32 %v876, 7
    %v878 = vsub.s32 %v875, %v877
    %v879 = vrot.slane %v869, %v878
    %v881 = vunpack.c.l.s4 1966171168
    %v882 = vunpack.c.0.s8 %v881
    %v883 = vlaneseq
    %v884 = vshrl.u32 %v883, 7
    %v885 = vsub.s32 %v882, %v884
    %v886 = vrot.slane %v870, %v885
    %v888 = vunpack.c.l.s4 1966171168
    %v889 = vunpack.c.0.s8 %v888
    %v890 = vlaneseq
    %v891 = vshrl.u32 %v890, 7
    %v892 = vsub.s32 %v889, %v891
    %v893 = vrot.slane %v871, %v892
    %v895 = vunpack.c.l.s4 1966171168
    %v896 = vunpack.c.0.s8 %v895
    %v897 = vlaneseq
    %v898 = vshrl.u32 %v897, 7
    %v899 = vsub.s32 %v896, %v898
    %v900 = vrot.slane %v872, %v899
    %v901 = vcombine.low %v879, %v886
    %v902 = vcombine.low %v893, %v900
    %v904 = vunpack.c.l.s4 1966171168
    %v905 = vunpack.c.0.s8 %v904
    %v906 = vlaneseq
    %v907 = vshrl.u32 %v906, 7
    %v908 = vsub.s32 %v905, %v907
    %v909 = vrot.slane %v901, %v908
    %v911 = vunpack.c.l.s4 1966171168
    %v912 = vunpack.c.0.s8 %v911
    %v913 = vlaneseq
    %v914 = vshrl.u32 %v913, 7
    %v915 = vsub.s32 %v912, %v914
    %v916 = vrot.slane %v902, %v915
    %v917 = vcombine.low %v909, %v916
    %920 = vst [vmem:[#allocation6] sm:$0xff] %v868
    %921 = vst [vmem:[#allocation6 + $0x8] sm:$0xff] %v917
    %v922 = vld [vmem:[%s69] sm:$0xff]
    %v923 = vld [vmem:[%s69 + $0x8] sm:$0xff]
    %vm924 = vcmp.eq.bf16.partialorder %v922, 0
    %vm925 = vcmp.eq.bf16.partialorder %v923, 0
    %v926 = vld [vmem:[%s5] ss:$8 sm:$0xf]
    %v927 = vld [vmem:[%s5] ss:$8 sm:$0xf0]
    %v928 = vor.u32 %v926, %v927
    %s929 = scalar_lea.vmem %s5, 64
    %v930 = vld [vmem:[%s929] ss:$8 sm:$0xf]
    %v931 = vld [vmem:[%s929] ss:$8 sm:$0xf0]
    %v932 = vor.u32 %v930, %v931
    %v933 = vadd.f32 %v928, %v868
    %v934 = vadd.f32 %v932, %v917
    %935 = vst [vmem:[%s5] ss:$8 sm:$0xf] %v933
    %936 = vst [vmem:[%s5] ss:$8 sm:$0xf0] %v933
    %937 = vst [vmem:[%s929] ss:$8 sm:$0xf] %v934
    %938 = vst [vmem:[%s929] ss:$8 sm:$0xf0] %v934
    %s939 = scalar_lea.vmem %s5, 1
    %v940 = vld [vmem:[%s939] ss:$8 sm:$0xf]
    %v941 = vld [vmem:[%s939] ss:$8 sm:$0xf0]
    %v942 = vor.u32 %v940, %v941
    %s943 = scalar_lea.vmem %s5, 65
    %v944 = vld [vmem:[%s943] ss:$8 sm:$0xf]
    %v945 = vld [vmem:[%s943] ss:$8 sm:$0xf0]
    %v946 = vor.u32 %v944, %v945
    %v947 = vsel %vm924, 65537, 0
    %v948 = vsel %vm925, 65537, 0
    %v949 = vunpack.c.l.b16 %v947
    %v950 = vunpack.c.h.b16 %v947
    %v951 = vunpack.c.l.b16 %v948
    %v952 = vunpack.c.h.b16 %v948
    %vm953 = vcmp.ne.s32.totalorder %v949, 0
    %vm954 = vcmp.ne.s32.totalorder %v950, 0
    %vm955 = vcmp.ne.s32.totalorder %v951, 0
    %vm956 = vcmp.ne.s32.totalorder %v952, 0
    %v957 = vsel %vm953, 1, 0
    %v958 = vsel %vm954, 1, 0
    %v959 = vsel %vm955, 1, 0
    %v960 = vsel %vm956, 1, 0
    %v961 = vlaneseq
    %v962 = vshrl.u32 %v961, 7
    %v963 = vsub.s32 0, %v962
    %v964 = vrot.slane %v957, %v963
    %v965 = vlaneseq
    %v966 = vshrl.u32 %v965, 7
    %v967 = vsub.s32 2, %v966
    %v968 = vrot.slane %v957, %v967
    %v969 = vlaneseq
    %v970 = vshrl.u32 %v969, 7
    %v971 = vsub.s32 4, %v970
    %v972 = vrot.slane %v957, %v971
    %v973 = vlaneseq
    %v974 = vshrl.u32 %v973, 7
    %v975 = vsub.s32 6, %v974
    %v976 = vrot.slane %v957, %v975
    %v977 = vlaneseq
    %v978 = vshrl.u32 %v977, 7
    %v979 = vsub.s32 0, %v978
    %v980 = vrot.slane %v958, %v979
    %v981 = vlaneseq
    %v982 = vshrl.u32 %v981, 7
    %v983 = vsub.s32 2, %v982
    %v984 = vrot.slane %v958, %v983
    %v985 = vlaneseq
    %v986 = vshrl.u32 %v985, 7
    %v987 = vsub.s32 4, %v986
    %v988 = vrot.slane %v958, %v987
    %v989 = vlaneseq
    %v990 = vshrl.u32 %v989, 7
    %v991 = vsub.s32 6, %v990
    %v992 = vrot.slane %v958, %v991
    %v993 = vlaneseq
    %v994 = vshrl.u32 %v993, 7
    %v995 = vsub.s32 0, %v994
    %v996 = vrot.slane %v959, %v995
    %v997 = vlaneseq
    %v998 = vshrl.u32 %v997, 7
    %v999 = vsub.s32 2, %v998
    %v1000 = vrot.slane %v959, %v999
    %v1001 = vlaneseq
    %v1002 = vshrl.u32 %v1001, 7
    %v1003 = vsub.s32 4, %v1002
    %v1004 = vrot.slane %v959, %v1003
    %v1005 = vlaneseq
    %v1006 = vshrl.u32 %v1005, 7
    %v1007 = vsub.s32 6, %v1006
    %v1008 = vrot.slane %v959, %v1007
    %v1009 = vlaneseq
    %v1010 = vshrl.u32 %v1009, 7
    %v1011 = vsub.s32 0, %v1010
    %v1012 = vrot.slane %v960, %v1011
    %v1013 = vlaneseq
    %v1014 = vshrl.u32 %v1013, 7
    %v1015 = vsub.s32 2, %v1014
    %v1016 = vrot.slane %v960, %v1015
    %v1017 = vlaneseq
    %v1018 = vshrl.u32 %v1017, 7
    %v1019 = vsub.s32 4, %v1018
    %v1020 = vrot.slane %v960, %v1019
    %v1021 = vlaneseq
    %v1022 = vshrl.u32 %v1021, 7
    %v1023 = vsub.s32 6, %v1022
    %v1024 = vrot.slane %v960, %v1023
    %vm1025 = vcmp.ne.s32.totalorder %v964, 0
    %vm1026 = vcmp.ne.s32.totalorder %v968, 0
    %vm1027 = vcmp.ne.s32.totalorder %v972, 0
    %vm1028 = vcmp.ne.s32.totalorder %v976, 0
    %vm1029 = vcmp.ne.s32.totalorder %v980, 0
    %vm1030 = vcmp.ne.s32.totalorder %v984, 0
    %vm1031 = vcmp.ne.s32.totalorder %v988, 0
    %vm1032 = vcmp.ne.s32.totalorder %v992, 0
    %vm1033 = vcmp.ne.s32.totalorder %v996, 0
    %vm1034 = vcmp.ne.s32.totalorder %v1000, 0
    %vm1035 = vcmp.ne.s32.totalorder %v1004, 0
    %vm1036 = vcmp.ne.s32.totalorder %v1008, 0
    %vm1037 = vcmp.ne.s32.totalorder %v1012, 0
    %vm1038 = vcmp.ne.s32.totalorder %v1016, 0
    %vm1039 = vcmp.ne.s32.totalorder %v1020, 0
    %vm1040 = vcmp.ne.s32.totalorder %v1024, 0
    %v1041 = vsel %vm1025, %v773, 0.0
    %v1042 = vsel %vm1026, %v775, 0.0
    %v1043 = vsel %vm1027, %v777, 0.0
    %v1044 = vsel %vm1028, %v779, 0.0
    %v1045 = vsel %vm1029, %v781, 0.0
    %v1046 = vsel %vm1030, %v783, 0.0
    %v1047 = vsel %vm1031, %v785, 0.0
    %v1048 = vsel %vm1032, %v787, 0.0
    %v1049 = vsel %vm1033, %v789, 0.0
    %v1050 = vsel %vm1034, %v791, 0.0
    %v1051 = vsel %vm1035, %v793, 0.0
    %v1052 = vsel %vm1036, %v795, 0.0
    %v1053 = vsel %vm1037, %v797, 0.0
    %v1054 = vsel %vm1038, %v799, 0.0
    %v1055 = vsel %vm1039, %v801, 0.0
    %v1056 = vsel %vm1040, %v803, 0.0
    %v1073 = vcombine.low %v1041, %v1042
    %v1074 = vcombine.low %v1043, %v1044
    %v1075 = vcombine.low %v1045, %v1046
    %v1076 = vcombine.low %v1047, %v1048
    %v1078 = vunpack.c.l.s4 1966171168
    %v1079 = vunpack.c.0.s8 %v1078
    %v1080 = vlaneseq
    %v1081 = vshrl.u32 %v1080, 7
    %v1082 = vsub.s32 %v1079, %v1081
    %v1083 = vrot.slane %v1073, %v1082
    %v1085 = vunpack.c.l.s4 1966171168
    %v1086 = vunpack.c.0.s8 %v1085
    %v1087 = vlaneseq
    %v1088 = vshrl.u32 %v1087, 7
    %v1089 = vsub.s32 %v1086, %v1088
    %v1090 = vrot.slane %v1074, %v1089
    %v1092 = vunpack.c.l.s4 1966171168
    %v1093 = vunpack.c.0.s8 %v1092
    %v1094 = vlaneseq
    %v1095 = vshrl.u32 %v1094, 7
    %v1096 = vsub.s32 %v1093, %v1095
    %v1097 = vrot.slane %v1075, %v1096
    %v1099 = vunpack.c.l.s4 1966171168
    %v1100 = vunpack.c.0.s8 %v1099
    %v1101 = vlaneseq
    %v1102 = vshrl.u32 %v1101, 7
    %v1103 = vsub.s32 %v1100, %v1102
    %v1104 = vrot.slane %v1076, %v1103
    %v1105 = vcombine.low %v1083, %v1090
    %v1106 = vcombine.low %v1097, %v1104
    %v1108 = vunpack.c.l.s4 1966171168
    %v1109 = vunpack.c.0.s8 %v1108
    %v1110 = vlaneseq
    %v1111 = vshrl.u32 %v1110, 7
    %v1112 = vsub.s32 %v1109, %v1111
    %v1113 = vrot.slane %v1105, %v1112
    %v1115 = vunpack.c.l.s4 1966171168
    %v1116 = vunpack.c.0.s8 %v1115
    %v1117 = vlaneseq
    %v1118 = vshrl.u32 %v1117, 7
    %v1119 = vsub.s32 %v1116, %v1118
    %v1120 = vrot.slane %v1106, %v1119
    %v1121 = vcombine.low %v1113, %v1120
    %v1122 = vcombine.low %v1049, %v1050
    %v1123 = vcombine.low %v1051, %v1052
    %v1124 = vcombine.low %v1053, %v1054
    %v1125 = vcombine.low %v1055, %v1056
    %v1127 = vunpack.c.l.s4 1966171168
    %v1128 = vunpack.c.0.s8 %v1127
    %v1129 = vlaneseq
    %v1130 = vshrl.u32 %v1129, 7
    %v1131 = vsub.s32 %v1128, %v1130
    %v1132 = vrot.slane %v1122, %v1131
    %v1134 = vunpack.c.l.s4 1966171168
    %v1135 = vunpack.c.0.s8 %v1134
    %v1136 = vlaneseq
    %v1137 = vshrl.u32 %v1136, 7
    %v1138 = vsub.s32 %v1135, %v1137
    %v1139 = vrot.slane %v1123, %v1138
    %v1141 = vunpack.c.l.s4 1966171168
    %v1142 = vunpack.c.0.s8 %v1141
    %v1143 = vlaneseq
    %v1144 = vshrl.u32 %v1143, 7
    %v1145 = vsub.s32 %v1142, %v1144
    %v1146 = vrot.slane %v1124, %v1145
    %v1148 = vunpack.c.l.s4 1966171168
    %v1149 = vunpack.c.0.s8 %v1148
    %v1150 = vlaneseq
    %v1151 = vshrl.u32 %v1150, 7
    %v1152 = vsub.s32 %v1149, %v1151
    %v1153 = vrot.slane %v1125, %v1152
    %v1154 = vcombine.low %v1132, %v1139
    %v1155 = vcombine.low %v1146, %v1153
    %v1157 = vunpack.c.l.s4 1966171168
    %v1158 = vunpack.c.0.s8 %v1157
    %v1159 = vlaneseq
    %v1160 = vshrl.u32 %v1159, 7
    %v1161 = vsub.s32 %v1158, %v1160
    %v1162 = vrot.slane %v1154, %v1161
    %v1164 = vunpack.c.l.s4 1966171168
    %v1165 = vunpack.c.0.s8 %v1164
    %v1166 = vlaneseq
    %v1167 = vshrl.u32 %v1166, 7
    %v1168 = vsub.s32 %v1165, %v1167
    %v1169 = vrot.slane %v1155, %v1168
    %v1170 = vcombine.low %v1162, %v1169
    %v1173 = vadd.f32 %v942, %v1121
    %v1174 = vadd.f32 %v946, %v1170
    %1175 = vst [vmem:[%s939] ss:$8 sm:$0xf] %v1173
    %1176 = vst [vmem:[%s939] ss:$8 sm:$0xf0] %v1173
    %1177 = vst [vmem:[%s943] ss:$8 sm:$0xf] %v1174
    %1178 = vst [vmem:[%s943] ss:$8 sm:$0xf0] %v1174
    %s1179 = scalar_lea.vmem %s5, 2
    %v1180 = vld [vmem:[%s1179] ss:$8 sm:$0xf]
    %v1181 = vld [vmem:[%s1179] ss:$8 sm:$0xf0]
    %v1182 = vor.u32 %v1180, %v1181
    %s1183 = scalar_lea.vmem %s5, 66
    %v1184 = vld [vmem:[%s1183] ss:$8 sm:$0xf]
    %v1185 = vld [vmem:[%s1183] ss:$8 sm:$0xf0]
    %v1186 = vor.u32 %v1184, %v1185
    %v1187 = vsel %vm1025, 1, 0
    %v1188 = vsel %vm1026, 1, 0
    %v1189 = vsel %vm1027, 1, 0
    %v1190 = vsel %vm1028, 1, 0
    %v1191 = vsel %vm1029, 1, 0
    %v1192 = vsel %vm1030, 1, 0
    %v1193 = vsel %vm1031, 1, 0
    %v1194 = vsel %vm1032, 1, 0
    %v1195 = vsel %vm1033, 1, 0
    %v1196 = vsel %vm1034, 1, 0
    %v1197 = vsel %vm1035, 1, 0
    %v1198 = vsel %vm1036, 1, 0
    %v1199 = vsel %vm1037, 1, 0
    %v1200 = vsel %vm1038, 1, 0
    %v1201 = vsel %vm1039, 1, 0
    %v1202 = vsel %vm1040, 1, 0
    %v1203 = vcvt.s32.f32 %v1187
    %v1204 = vcvt.s32.f32 %v1188
    %v1205 = vcvt.s32.f32 %v1189
    %v1206 = vcvt.s32.f32 %v1190
    %v1207 = vcvt.s32.f32 %v1191
    %v1208 = vcvt.s32.f32 %v1192
    %v1209 = vcvt.s32.f32 %v1193
    %v1210 = vcvt.s32.f32 %v1194
    %v1211 = vcvt.s32.f32 %v1195
    %v1212 = vcvt.s32.f32 %v1196
    %v1213 = vcvt.s32.f32 %v1197
    %v1214 = vcvt.s32.f32 %v1198
    %v1215 = vcvt.s32.f32 %v1199
    %v1216 = vcvt.s32.f32 %v1200
    %v1217 = vcvt.s32.f32 %v1201
    %v1218 = vcvt.s32.f32 %v1202
    %v1235 = vcombine.low %v1203, %v1204
    %v1236 = vcombine.low %v1205, %v1206
    %v1237 = vcombine.low %v1207, %v1208
    %v1238 = vcombine.low %v1209, %v1210
    %v1240 = vunpack.c.l.s4 1966171168
    %v1241 = vunpack.c.0.s8 %v1240
    %v1242 = vlaneseq
    %v1243 = vshrl.u32 %v1242, 7
    %v1244 = vsub.s32 %v1241, %v1243
    %v1245 = vrot.slane %v1235, %v1244
    %v1247 = vunpack.c.l.s4 1966171168
    %v1248 = vunpack.c.0.s8 %v1247
    %v1249 = vlaneseq
    %v1250 = vshrl.u32 %v1249, 7
    %v1251 = vsub.s32 %v1248, %v1250
    %v1252 = vrot.slane %v1236, %v1251
    %v1254 = vunpack.c.l.s4 1966171168
    %v1255 = vunpack.c.0.s8 %v1254
    %v1256 = vlaneseq
    %v1257 = vshrl.u32 %v1256, 7
    %v1258 = vsub.s32 %v1255, %v1257
    %v1259 = vrot.slane %v1237, %v1258
    %v1261 = vunpack.c.l.s4 1966171168
    %v1262 = vunpack.c.0.s8 %v1261
    %v1263 = vlaneseq
    %v1264 = vshrl.u32 %v1263, 7
    %v1265 = vsub.s32 %v1262, %v1264
    %v1266 = vrot.slane %v1238, %v1265
    %v1267 = vcombine.low %v1245, %v1252
    %v1268 = vcombine.low %v1259, %v1266
    %v1270 = vunpack.c.l.s4 1966171168
    %v1271 = vunpack.c.0.s8 %v1270
    %v1272 = vlaneseq
    %v1273 = vshrl.u32 %v1272, 7
    %v1274 = vsub.s32 %v1271, %v1273
    %v1275 = vrot.slane %v1267, %v1274
    %v1277 = vunpack.c.l.s4 1966171168
    %v1278 = vunpack.c.0.s8 %v1277
    %v1279 = vlaneseq
    %v1280 = vshrl.u32 %v1279, 7
    %v1281 = vsub.s32 %v1278, %v1280
    %v1282 = vrot.slane %v1268, %v1281
    %v1283 = vcombine.low %v1275, %v1282
    %v1284 = vcombine.low %v1211, %v1212
    %v1285 = vcombine.low %v1213, %v1214
    %v1286 = vcombine.low %v1215, %v1216
    %v1287 = vcombine.low %v1217, %v1218
    %v1289 = vunpack.c.l.s4 1966171168
    %v1290 = vunpack.c.0.s8 %v1289
    %v1291 = vlaneseq
    %v1292 = vshrl.u32 %v1291, 7
    %v1293 = vsub.s32 %v1290, %v1292
    %v1294 = vrot.slane %v1284, %v1293
    %v1296 = vunpack.c.l.s4 1966171168
    %v1297 = vunpack.c.0.s8 %v1296
    %v1298 = vlaneseq
    %v1299 = vshrl.u32 %v1298, 7
    %v1300 = vsub.s32 %v1297, %v1299
    %v1301 = vrot.slane %v1285, %v1300
    %v1303 = vunpack.c.l.s4 1966171168
    %v1304 = vunpack.c.0.s8 %v1303
    %v1305 = vlaneseq
    %v1306 = vshrl.u32 %v1305, 7
    %v1307 = vsub.s32 %v1304, %v1306
    %v1308 = vrot.slane %v1286, %v1307
    %v1310 = vunpack.c.l.s4 1966171168
    %v1311 = vunpack.c.0.s8 %v1310
    %v1312 = vlaneseq
    %v1313 = vshrl.u32 %v1312, 7
    %v1314 = vsub.s32 %v1311, %v1313
    %v1315 = vrot.slane %v1287, %v1314
    %v1316 = vcombine.low %v1294, %v1301
    %v1317 = vcombine.low %v1308, %v1315
    %v1319 = vunpack.c.l.s4 1966171168
    %v1320 = vunpack.c.0.s8 %v1319
    %v1321 = vlaneseq
    %v1322 = vshrl.u32 %v1321, 7
    %v1323 = vsub.s32 %v1320, %v1322
    %v1324 = vrot.slane %v1316, %v1323
    %v1326 = vunpack.c.l.s4 1966171168
    %v1327 = vunpack.c.0.s8 %v1326
    %v1328 = vlaneseq
    %v1329 = vshrl.u32 %v1328, 7
    %v1330 = vsub.s32 %v1327, %v1329
    %v1331 = vrot.slane %v1317, %v1330
    %v1332 = vcombine.low %v1324, %v1331
    %v1335 = vadd.f32 %v1182, %v1283
    %v1336 = vadd.f32 %v1186, %v1332
    %1337 = vst [vmem:[%s1179] ss:$8 sm:$0xf] %v1335
    %1338 = vst [vmem:[%s1179] ss:$8 sm:$0xf0] %v1335
    %1339 = vst [vmem:[%s1183] ss:$8 sm:$0xf] %v1336
    %1340 = vst [vmem:[%s1183] ss:$8 sm:$0xf0] %v1336
    // Predicated region
    $region26: #{lr_forward.1} parent=1 // pred_check
      _
    $region27: #{lr_forward.1} parent=1 // pred_check_branch
      %1342 = sbr.rel (0) target = $region29
    $region28: #{lr_forward.1} parent=1 // pred_region
      %s1343 = sadd.s32 0, 0
      %p1344 = scmp.lt.s32.totalorder %s1343, 0
      %s1345 = scalar_select %p1344, %s1343, 0
      %s1346 = smul.u32 16, %s1345
      %s1348 = ssub.s32 256, 256
      %1349 = vsyncadd [#allocation5], %s1348
      %s1350 = smul.addr %s1346, 16
      %s1351 = scalar_lea.hbm %s4, %s1350
      %s1353 = sshll.u32 [#allocation6], 4
      %s1354 = int_to_ptr.vmem [resolvable:$true] %s1353
      %1356 = dma.vmem_to_hbm [thread:$0]  %s1354, 256, %s1351, [#allocation5]
    $region29: #{lr_forward.1} parent=1 // pred_fallthru
      _
    // Predicated region
    $region30: #{lr_forward.1} parent=1 // pred_check
      _
    $region31: #{lr_forward.1} parent=1 // pred_check_branch
      %1358 = sbr.rel (0) target = $region33
    $region32: #{lr_forward.1} parent=1 // pred_region
      _
    $region33: #{lr_forward.1} parent=1 // pred_fallthru
      _
    // Predicated region
    $region34: #{lr_forward.1} parent=1 // pred_check
      _
    $region35: #{lr_forward.1} parent=1 // pred_check_branch
      %1360 = sbr.rel (0) target = $region37
    $region36: #{lr_forward.1} parent=1 // pred_region
      %1361 = dma.done [#allocation5], 256
    $region37: #{lr_forward.1} parent=1 // pred_fallthru
      _
    // Predicated region
    $region38: #{lr_forward.1} parent=1 // pred_check
      _
    $region39: #{lr_forward.1} parent=1 // pred_check_branch
      %1363 = sbr.rel (0) target = $region41
    $region40: #{lr_forward.1} parent=1 // pred_region
      _
    $region41: #{lr_forward.1} parent=1 // pred_fallthru
      _
    %1364 = vsyncpa [#allocation4], 1
    %1365 = vsyncpa [#allocation5], 1

</llo_original>
